<compile_context>
chip_gen: v7x
topology: tpu7x:2x2x1
jax: 0.10.0
libtpu: 0.0.40
codegen_flags: <defaults>
</compile_context>

<pallas_src>
import functools

import jax
import jax.numpy as jnp
from jax import lax
from jax.experimental import pallas as pl
from jax.experimental.pallas import tpu as pltpu


def _round_up(n, m):
    return (n + m - 1) // m * m


def _cdiv(a, b):
    return -(-a // b)


@functools.lru_cache(maxsize=1)
def _device_vmem_bytes():
    # Generation-aware VMEM capacity (128 MiB on v5e/v6e, 64 MiB on v7x).
    try:
        info = pltpu.get_tpu_info()
        v = int(getattr(info, "vmem_capacity_bytes", 0))
        if v > 0:
            return v
    except Exception:
        pass
    return 64 * 1024 * 1024  # conservative fallback (v7x-sized)


def _vmem_limit_bytes(needed, usable):
    # Never request more scoped VMEM than the chip physically has (minus the
    # headroom baked into `usable`); never less than the default scoped limit.
    return int(min(usable, max(32 * 1024 * 1024, needed)))


# ---------------------------------------------------------------------------
# Fused path kernel: one (C, HW) slab per batch resident in VMEM.
# ---------------------------------------------------------------------------
def _ca_fused_kernel(x_ref, w1_ref, b1_ref, w2_ref, b2_ref, o_ref, *, inv_hw):
    # Global average pool: f32 accumulation over the lane (spatial) axis.
    # The block's trailing dims equal the full (C, HW) extents, so Mosaic masks
    # the non-128-aligned lane tail in the reduction.
    s_col = jnp.sum(x_ref[0].astype(jnp.float32), axis=1, keepdims=True)  # (C,1)

    # Tiny gate path in lane-dense row form: (1,C) @ (C,Cr) @ (Cr,C).  This is
    # O(C*Cr) filler under the HBM roofline; do not micro-optimize.
    m_row = jnp.transpose(s_col) * inv_hw                                # (1, C)
    y1 = jnp.dot(m_row, w1_ref[...],
                 preferred_element_type=jnp.float32) + b1_ref[...]       # (1, Cr)
    y2 = jnp.dot(y1, w2_ref[...],
                 preferred_element_type=jnp.float32) + b2_ref[...]       # (1, C)
    a_col = jnp.transpose(jax.nn.sigmoid(y2))                            # (C, 1)

    # Gate in the input dtype: no full-slab f32 copy on the load/store path.
    o_ref[0] = x_ref[0] * a_col.astype(o_ref.dtype)


# ---------------------------------------------------------------------------
# Split path kernels.
# ---------------------------------------------------------------------------
def _pool_partial_kernel(x_ref, s_ref, *, hw, thw):
    # Per-(batch, chunk, channel) partial spatial sums in f32.  Both grid axes
    # are "parallel" (no cross-step accumulation).
    x = x_ref[0].astype(jnp.float32)                       # (C, thw)
    if hw % thw != 0:
        # Last chunk along HW is partial: out-of-bounds lanes hold garbage
        # from the clamped DMA; mask them before the reduce.
        rem = hw - pl.program_id(1) * thw
        lane = lax.broadcasted_iota(jnp.int32, x.shape, dimension=1)
        x = jnp.where(lane < rem, x, 0.0)
    s_ref[0, 0] = jnp.sum(x, axis=1, keepdims=True)        # (C, 1)


def _gate_mul_kernel(x_ref, g_ref, o_ref):
    # Pure broadcast multiply in the input dtype; g block is (1, C, 1).
    # OOB lanes of a partial last chunk compute garbage but the writeback DMA
    # is clamped to the array bounds, so they are dropped.
    o_ref[0] = x_ref[0] * g_ref[0].astype(o_ref.dtype)


# ---------------------------------------------------------------------------
# Wrapper.
# ---------------------------------------------------------------------------
@functools.partial(
    jax.jit,
    static_argnames=("vmem_budget_bytes", "split_block_bytes", "force_split"))
def channel_attention(x, w1, b1, w2, b2, *,
                      vmem_budget_bytes=None,
                      split_block_bytes=2 * 1024 * 1024,
                      force_split=False):
    """SE-style channel attention gate.

    x : (B, C, H, W); w1: (Cr, C); b1: (Cr,); w2: (C, Cr); b2: (C,).

    The fused single-slab-per-batch path is chosen whenever its double-buffered
    working set fits the *device's* VMEM (queried via pltpu.get_tpu_info, minus
    ~8 MiB headroom), so 128 MiB parts (v5e/v6e) keep much larger slabs fused
    than 64 MiB parts (v7x).  `vmem_budget_bytes` optionally lowers that budget.
    """
    B, C, H, W = x.shape
    HW = H * W
    Cr = w1.shape[0]
    itemsize = jnp.dtype(x.dtype).itemsize

    device_vmem = _device_vmem_bytes()
    usable_vmem = max(32 * 1024 * 1024, device_vmem - 8 * 1024 * 1024)
    if vmem_budget_bytes is not None:
        usable_vmem = min(usable_vmem, int(vmem_budget_bytes))

    # Row-form (lane-dense) f32 weights / biases for the gate path.
    w1t = jnp.asarray(w1, jnp.float32).T          # (C, Cr)
    w2t = jnp.asarray(w2, jnp.float32).T          # (Cr, C)
    b1r = jnp.asarray(b1, jnp.float32).reshape(1, Cr)
    b2r = jnp.asarray(b2, jnp.float32).reshape(1, C)

    # Free view: NCHW with trailing dims collapsed (no pad, no copy).
    x3 = x.reshape(B, C, HW)

    # Per-batch slab footprint in VMEM (tile-padded), 2 in + 2 out buffers.
    slab_vmem = _round_up(C, 8) * _round_up(HW, 128) * itemsize
    fused_need = 4 * slab_vmem + (4 << 20)
    use_fused = (not force_split) and (fused_need <= usable_vmem)

    if use_fused:
        kernel = functools.partial(_ca_fused_kernel, inv_hw=1.0 / HW)
        out = pl.pallas_call(
            kernel,
            out_shape=jax.ShapeDtypeStruct((B, C, HW), x.dtype),
            grid_spec=pltpu.PrefetchScalarGridSpec(
                num_scalar_prefetch=0,
                grid=(B,),
                in_specs=[
                    pl.BlockSpec((1, C, HW), lambda b: (b, 0, 0)),   # x slab
                    pl.BlockSpec((C, Cr), lambda b: (0, 0)),         # w1 (row form)
                    pl.BlockSpec((1, Cr), lambda b: (0, 0)),         # b1
                    pl.BlockSpec((Cr, C), lambda b: (0, 0)),         # w2 (row form)
                    pl.BlockSpec((1, C), lambda b: (0, 0)),          # b2
                ],
                out_specs=pl.BlockSpec((1, C, HW), lambda b: (b, 0, 0)),
            ),
            compiler_params=pltpu.CompilerParams(
                dimension_semantics=("parallel",),
                vmem_limit_bytes=_vmem_limit_bytes(usable_vmem, usable_vmem),
            ),
            cost_estimate=pl.CostEstimate(
                flops=int(2 * B * C * HW + 4 * B * C * Cr),
                transcendentals=int(B * C),
                bytes_accessed=int(2 * B * C * HW * itemsize),
            ),
        )(x3, w1t, b1r, w2t, b2r)
        return out.reshape(B, C, H, W)

    # ------------------------------------------------------------------
    # Split path (large-slab fallback): pool partials -> XLA gate -> multiply.
    # ------------------------------------------------------------------
    # Lane chunk width: multiple of 128, sized so a (C, thw) block is about
    # `split_block_bytes` (>= ~2 MiB keeps grid-step overhead negligible)
    # while several double-buffered blocks still fit VMEM.  A single full-dim
    # chunk is used when HW itself is small (no alignment needed then).
    c_pad = _round_up(C, 8)
    cap_bytes = max(128 * c_pad * itemsize, usable_vmem // 6)
    thw_cap = max(128, (cap_bytes // (c_pad * itemsize)) // 128 * 128)
    tgt_bytes = max(int(split_block_bytes), 128 * c_pad * itemsize)
    thw = _round_up(_cdiv(tgt_bytes, c_pad * itemsize), 128)
    thw = max(128, min(thw, thw_cap))
    if thw >= HW:
        thw = HW                      # single full-width (full-dim) chunk
    n_chunks = _cdiv(HW, thw)
    chunk_vmem = c_pad * _round_up(thw, 128) * itemsize

    # Pass 1: per-(batch, chunk, channel) partial sums; both axes "parallel"
    # so the full HBM read of x shards across both v7x TCs even at B == 1.
    pool_kernel = functools.partial(_pool_partial_kernel, hw=HW, thw=thw)
    partials = pl.pallas_call(
        pool_kernel,
        out_shape=jax.ShapeDtypeStruct((B, n_chunks, C, 1), jnp.float32),
        grid_spec=pltpu.PrefetchScalarGridSpec(
            num_scalar_prefetch=0,
            grid=(B, n_chunks),
            in_specs=[pl.BlockSpec((1, C, thw), lambda b, h: (b, 0, h))],
            out_specs=pl.BlockSpec((1, 1, C, 1), lambda b, h: (b, h, 0, 0)),
        ),
        compiler_params=pltpu.CompilerParams(
            dimension_semantics=("parallel", "parallel"),
            vmem_limit_bytes=_vmem_limit_bytes(3 * chunk_vmem + (4 << 20),
                                               usable_vmem),
        ),
        cost_estimate=pl.CostEstimate(
            flops=int(B * C * HW),
            transcendentals=0,
            bytes_accessed=int(B * C * HW * itemsize),
        ),
    )(x3)

    # Chunk reduction + tiny projections batched across B in plain XLA: one
    # real matmul chain instead of per-grid-step matvecs.
    means = jnp.sum(partials[..., 0], axis=1) * (1.0 / HW)          # (B, C)
    gate = jax.nn.sigmoid((means @ w1t + b1r) @ w2t + b2r)          # (B, C) f32
    gate3 = gate.reshape(B, C, 1)

    # Pass 2: pure chunked broadcast-multiply; both grid axes "parallel".
    out = pl.pallas_call(
        _gate_mul_kernel,
        out_shape=jax.ShapeDtypeStruct((B, C, HW), x.dtype),
        grid_spec=pltpu.PrefetchScalarGridSpec(
            num_scalar_prefetch=0,
            grid=(B, n_chunks),
            in_specs=[
                pl.BlockSpec((1, C, thw), lambda b, h: (b, 0, h)),
                pl.BlockSpec((1, C, 1), lambda b, h: (b, 0, 0)),
            ],
            out_specs=pl.BlockSpec((1, C, thw), lambda b, h: (b, 0, h)),
        ),
        compiler_params=pltpu.CompilerParams(
            dimension_semantics=("parallel", "parallel"),
            vmem_limit_bytes=_vmem_limit_bytes(5 * chunk_vmem + (4 << 20),
                                               usable_vmem),
        ),
        cost_estimate=pl.CostEstimate(
            flops=int(B * C * HW),
            transcendentals=0,
            bytes_accessed=int(2 * B * C * HW * itemsize),
        ),
    )(x3, gate3)
    return out.reshape(B, C, H, W)


def _reference(x, w1, b1, w2, b2):
    m = x.mean(axis=(2, 3))                       # (B, C)
    y1 = m @ w1.T + b1                            # (B, Cr)
    y2 = y1 @ w2.T + b2                           # (B, C)
    a = jax.nn.sigmoid(y2)[:, :, None, None]      # (B, C, 1, 1)
    return x * a


if __name__ == "__main__":
    reduction = 8

    def run_case(B, C, H, W, **kw):
        Cr = max(1, C // reduction)
        key = jax.random.PRNGKey(0)
        kx, k1, k2, k3, k4 = jax.random.split(key, 5)
        x = jax.random.normal(kx, (B, C, H, W), dtype=jnp.float32)
        w1 = jax.random.normal(k1, (Cr, C), dtype=jnp.float32) * 0.1
        b1 = jax.random.normal(k2, (Cr,), dtype=jnp.float32) * 0.1
        w2 = jax.random.normal(k3, (C, Cr), dtype=jnp.float32) * 0.1
        b2 = jax.random.normal(k4, (C,), dtype=jnp.float32) * 0.1

        out = jax.block_until_ready(channel_attention(x, w1, b1, w2, b2, **kw))
        ref = _reference(x, w1, b1, w2, b2)
        assert out.shape == (B, C, H, W)
        assert jnp.allclose(out, ref, atol=1e-5, rtol=1e-5), "mismatch vs reference"

    # Fused single-slab path (H*W a multiple of 128).
    run_case(2, 32, 16, 16)
    # Fused path, non-128-aligned H*W (masked lane-tail loads/stores, no pad copy).
    run_case(2, 32, 10, 10)
    # Split path: single full-width (full-dim) chunk, HW < 128.
    run_case(2, 32, 10, 10, force_split=True)
    # Split path: several 128-lane chunks with a partial (masked) last chunk.
    run_case(2, 32, 24, 24, force_split=True, split_block_bytes=16 * 1024)

    print("KERNEL_OK")
</pallas_src>

<mosaic_0001>
module attributes {stable_mosaic.version = 11 : i64} {
  func.func @_ca_fused_kernel(%arg0: i32, %arg1: memref<1x32x256xf32, #tpu.memory_space<vmem>>, %arg2: memref<32x4xf32, #tpu.memory_space<vmem>>, %arg3: memref<1x4xf32, #tpu.memory_space<vmem>>, %arg4: memref<4x32xf32, #tpu.memory_space<vmem>>, %arg5: memref<1x32xf32, #tpu.memory_space<vmem>>, %arg6: memref<1x32x256xf32, #tpu.memory_space<vmem>>) attributes {dimension_semantics = [#tpu.dimension_semantics<parallel>], iteration_bounds = array<i64: 2>, scalar_prefetch = 0 : i64, scratch_operands = 0 : i64, tpu.core_type = #tpu.core_type<tc>, window_params = [{transform_indices = @transform_0, window_bounds = array<i64: 1, 32, 256>}, {pipeline_mode = #tpu.pipeline_mode<synchronous>, transform_indices = @transform_1, window_bounds = array<i64: 32, 4>}, {pipeline_mode = #tpu.pipeline_mode<synchronous>, transform_indices = @transform_2, window_bounds = array<i64: 1, 4>}, {pipeline_mode = #tpu.pipeline_mode<synchronous>, transform_indices = @transform_3, window_bounds = array<i64: 4, 32>}, {pipeline_mode = #tpu.pipeline_mode<synchronous>, transform_indices = @transform_4, window_bounds = array<i64: 1, 32>}, {transform_indices = @transform_5, window_bounds = array<i64: 1, 32, 256>}]} {
    %c0 = arith.constant 0 : index
    %c0_0 = arith.constant 0 : index
    %c0_1 = arith.constant 0 : index
    %0 = vector.load %arg1[%c0, %c0_0, %c0_1] : memref<1x32x256xf32, #tpu.memory_space<vmem>>, vector<1x32x256xf32>
    %1 = vector.shape_cast %0 : vector<1x32x256xf32> to vector<32x256xf32>
    %cst = arith.constant dense<0.000000e+00> : vector<32xf32>
    %2 = vector.multi_reduction <add>, %1, %cst [1] : vector<32x256xf32> to vector<32xf32>
    %3 = vector.shape_cast %2 : vector<32xf32> to vector<32x1xf32>
    %4 = tpu.transpose %3, [1, 0] : vector<32x1xf32> -> vector<1x32xf32>
    %cst_2 = arith.constant 3.906250e-03 : f32
    %5 = vector.broadcast %cst_2 : f32 to vector<1x32xf32>
    %6 = arith.mulf %4, %5 : vector<1x32xf32>
    %c0_3 = arith.constant 0 : index
    %c0_4 = arith.constant 0 : index
    %7 = vector.load %arg2[%c0_3, %c0_4] : memref<32x4xf32, #tpu.memory_space<vmem>>, vector<32x4xf32>
    %cst_5 = arith.constant dense<0.000000e+00> : vector<1x4xf32>
    %8 = tpu.matmul %6, %7, %cst_5 {dimension_numbers = #tpu.dot_dimension_numbers<[1], [0], [0], [1], [0, 0, 1, 1], [], []>} : vector<1x32xf32>, vector<32x4xf32>, vector<1x4xf32> -> vector<1x4xf32>
    %c0_6 = arith.constant 0 : index
    %c0_7 = arith.constant 0 : index
    %9 = vector.load %arg3[%c0_6, %c0_7] : memref<1x4xf32, #tpu.memory_space<vmem>>, vector<1x4xf32>
    %10 = arith.addf %8, %9 : vector<1x4xf32>
    %c0_8 = arith.constant 0 : index
    %c0_9 = arith.constant 0 : index
    %11 = vector.load %arg4[%c0_8, %c0_9] : memref<4x32xf32, #tpu.memory_space<vmem>>, vector<4x32xf32>
    %cst_10 = arith.constant dense<0.000000e+00> : vector<1x32xf32>
    %12 = tpu.matmul %10, %11, %cst_10 {dimension_numbers = #tpu.dot_dimension_numbers<[1], [0], [0], [1], [0, 0, 1, 1], [], []>} : vector<1x4xf32>, vector<4x32xf32>, vector<1x32xf32> -> vector<1x32xf32>
    %c0_11 = arith.constant 0 : index
    %c0_12 = arith.constant 0 : index
    %13 = vector.load %arg5[%c0_11, %c0_12] : memref<1x32xf32, #tpu.memory_space<vmem>>, vector<1x32xf32>
    %14 = arith.addf %12, %13 : vector<1x32xf32>
    %15 = arith.negf %14 : vector<1x32xf32>
    %16 = math.exp %15 : vector<1x32xf32>
    %cst_13 = arith.constant 1.000000e+00 : f32
    %17 = vector.broadcast %cst_13 : f32 to vector<1x32xf32>
    %18 = arith.addf %17, %16 : vector<1x32xf32>
    %19 = arith.divf %17, %18 : vector<1x32xf32>
    %20 = tpu.transpose %19, [1, 0] : vector<1x32xf32> -> vector<32x1xf32>
    %c0_14 = arith.constant 0 : index
    %c0_15 = arith.constant 0 : index
    %c0_16 = arith.constant 0 : index
    %21 = vector.load %arg1[%c0_14, %c0_15, %c0_16] : memref<1x32x256xf32, #tpu.memory_space<vmem>>, vector<1x32x256xf32>
    %22 = vector.shape_cast %21 : vector<1x32x256xf32> to vector<32x256xf32>
    %23 = vector.broadcast %20 : vector<32x1xf32> to vector<32x256xf32>
    %24 = arith.mulf %22, %23 : vector<32x256xf32>
    %c0_17 = arith.constant 0 : index
    %c0_18 = arith.constant 0 : index
    %c0_19 = arith.constant 0 : index
    %25 = vector.load %arg6[%c0_17, %c0_18, %c0_19] : memref<1x32x256xf32, #tpu.memory_space<vmem>>, vector<1x32x256xf32>
    %26 = vector.shape_cast %25 : vector<1x32x256xf32> to vector<32x256xf32>
    %27 = vector.shape_cast %24 : vector<32x256xf32> to vector<1x32x256xf32>
    tpu.vector_store %arg6[%c0_17, %c0_18, %c0_19], %27 {strides = array<i32>} : memref<1x32x256xf32, #tpu.memory_space<vmem>>, vector<1x32x256xf32>,
    return
  }
  func.func @transform_0(%arg0: i32) -> (i32, i32, i32) {
    %c0_i32 = arith.constant 0 : i32
    %c0_i32_0 = arith.constant 0 : i32
    %c0_i32_1 = arith.constant 0 : i32
    return %arg0, %c0_i32, %c0_i32_0 : i32, i32, i32
  }
  func.func @transform_1(%arg0: i32) -> (i32, i32) {
    %c0_i32 = arith.constant 0 : i32
    %c0_i32_0 = arith.constant 0 : i32
    %c0_i32_1 = arith.constant 0 : i32
    return %c0_i32, %c0_i32_0 : i32, i32
  }
  func.func @transform_2(%arg0: i32) -> (i32, i32) {
    %c0_i32 = arith.constant 0 : i32
    %c0_i32_0 = arith.constant 0 : i32
    %c0_i32_1 = arith.constant 0 : i32
    return %c0_i32, %c0_i32_0 : i32, i32
  }
  func.func @transform_3(%arg0: i32) -> (i32, i32) {
    %c0_i32 = arith.constant 0 : i32
    %c0_i32_0 = arith.constant 0 : i32
    %c0_i32_1 = arith.constant 0 : i32
    return %c0_i32, %c0_i32_0 : i32, i32
  }
  func.func @transform_4(%arg0: i32) -> (i32, i32) {
    %c0_i32 = arith.constant 0 : i32
    %c0_i32_0 = arith.constant 0 : i32
    %c0_i32_1 = arith.constant 0 : i32
    return %c0_i32, %c0_i32_0 : i32, i32
  }
  func.func @transform_5(%arg0: i32) -> (i32, i32, i32) {
    %c0_i32 = arith.constant 0 : i32
    %c0_i32_0 = arith.constant 0 : i32
    %c0_i32_1 = arith.constant 0 : i32
    return %arg0, %c0_i32, %c0_i32_0 : i32, i32, i32
  }
}

</mosaic_0001>

<llo_original>
// kernel: channel_attention.1
$region0: #{channel_attention.1}
  #allocation0 [shape = 'u32[]', space=smem, size = 0x4, offset = 0x4, fixed_abs, tag = 'smem constant byte address 0x4 - core index']
  #allocation1 [shape = 'u32[144,128]{1,0:T(1,128)}', space=vmem, size = 0x12000, scoped, tag = 'internal scratch']
  %s0 = inlined_call_operand.vmem [shape: f32[2,32,256], index: 0, kind: input, shape index: {}]
  %s1 = inlined_call_operand.vmem [shape: f32[32,4], index: 1, kind: input, shape index: {}]
  %s2 = inlined_call_operand.vmem [shape: f32[1,4], index: 2, kind: input, shape index: {}]
  %s3 = inlined_call_operand.vmem [shape: f32[4,32], index: 3, kind: input, shape index: {}]
  %s4 = inlined_call_operand.vmem [shape: f32[1,32], index: 4, kind: input, shape index: {}]
  %s5 = inlined_call_operand.vmem [shape: f32[2,32,256], index: 5, kind: output, shape index: {}]
  %s6 = sld [smem:[#allocation0]]
  $region53: #{channel_attention.1} parent=0
    _
  %s8 = ssub.s32 1, %s6
  %s9 = scalar_select 0, %s8, %s6
  loop: start=0, step=1, limit=4
  $region2: #{channel_attention.1} parent=0 // loop_pre_header
    _
  $region3: #{channel_attention.1} parent=0 // loop_header
    %s11 = sphi 0, %s15
    %p12 = scmp.ge.s32.totalorder %s11, 4
    %s21 = sphi 0, %s23
    %s24 = sphi 0, %s21
    %s25 = sphi 0, %s24
    %s41 = sphi 0, %s25
    %s45 = sphi 0, %s45
    %s47 = sphi 0, %s45
    %s48 = sphi 0, %s47
    %s62 = sphi 0, %s48
    %s66 = sphi 0, %s66
    %s68 = sphi 0, %s66
    %s69 = sphi 0, %s68
    %s83 = sphi 0, %s69
    %s87 = sphi 0, %s87
    %s89 = sphi 0, %s87
    %s90 = sphi 0, %s89
    %s104 = sphi 0, %s90
    %s108 = sphi 0, %s108
    %s110 = sphi 0, %s108
    %s111 = sphi 0, %s110
    %s125 = sphi 0, %s111
    %s131 = sphi 0, %s133
    %s134 = sphi 0, %s131
    %s135 = sphi 0, %s134
    %s151 = sphi 0, %s135
  $region4: #{channel_attention.1} parent=0 // loop_header_branch
    %14 = sbr.rel (%p12) target = $region8
  $region5: #{channel_attention.1} parent=0 // loop_body
    %s16 = ssub.s32 %s11, 1
    %s17 = ssub.s32 %s11, 2
    %s18 = sadd.s32 %s11, 1
    %s19 = ssub.s32 %s11, %s18
    %p20 = scmp.eq.s32.totalorder %s19, 0
    %s22 = sadd.s32 %s21, 1
    %s23 = scalar_select %p20, %s21, %s22
    %p26 = pneg %p20
    %p27 = scmp.eq.s32.totalorder %s11, 1
    %p28 = por %p26, %p27
    %p29 = scmp.ne.s32.totalorder %s21, %s24
    %p30 = scmp.eq.s32.totalorder %s11, 0
    %p31 = por %p29, %p30
    %p32 = scmp.ne.s32.totalorder %s21, %s24
    %p33 = scmp.eq.s32.totalorder %s16, 1
    %p34 = por %p32, %p33
    %p35 = scmp.ne.s32.totalorder %s24, %s25
    %p36 = scmp.eq.s32.totalorder %s16, 0
    %p37 = por %p35, %p36
    %p38 = scmp.ne.s32.totalorder %s24, %s25
    %p39 = scmp.eq.s32.totalorder %s17, 1
    %p40 = por %p38, %p39
    %p42 = scmp.ne.s32.totalorder %s25, %s41
    %p43 = scmp.eq.s32.totalorder %s17, 0
    %p44 = por %p42, %p43
    %s46 = sadd.s32 %s45, 1
    %p49 = scmp.eq.s32.totalorder %s11, 1
    %p50 = scmp.ne.s32.totalorder %s45, %s47
    %p51 = scmp.eq.s32.totalorder %s11, 0
    %p52 = por %p50, %p51
    %p53 = scmp.ne.s32.totalorder %s45, %s47
    %p54 = scmp.eq.s32.totalorder %s16, 1
    %p55 = por %p53, %p54
    %p56 = scmp.ne.s32.totalorder %s47, %s48
    %p57 = scmp.eq.s32.totalorder %s16, 0
    %p58 = por %p56, %p57
    %p59 = scmp.ne.s32.totalorder %s47, %s48
    %p60 = scmp.eq.s32.totalorder %s17, 1
    %p61 = por %p59, %p60
    %p63 = scmp.ne.s32.totalorder %s48, %s62
    %p64 = scmp.eq.s32.totalorder %s17, 0
    %p65 = por %p63, %p64
    %s67 = sadd.s32 %s66, 1
    %p70 = scmp.eq.s32.totalorder %s11, 1
    %p71 = scmp.ne.s32.totalorder %s66, %s68
    %p72 = scmp.eq.s32.totalorder %s11, 0
    %p73 = por %p71, %p72
    %p74 = scmp.ne.s32.totalorder %s66, %s68
    %p75 = scmp.eq.s32.totalorder %s16, 1
    %p76 = por %p74, %p75
    %p77 = scmp.ne.s32.totalorder %s68, %s69
    %p78 = scmp.eq.s32.totalorder %s16, 0
    %p79 = por %p77, %p78
    %p80 = scmp.ne.s32.totalorder %s68, %s69
    %p81 = scmp.eq.s32.totalorder %s17, 1
    %p82 = por %p80, %p81
    %p84 = scmp.ne.s32.totalorder %s69, %s83
    %p85 = scmp.eq.s32.totalorder %s17, 0
    %p86 = por %p84, %p85
    %s88 = sadd.s32 %s87, 1
    %p91 = scmp.eq.s32.totalorder %s11, 1
    %p92 = scmp.ne.s32.totalorder %s87, %s89
    %p93 = scmp.eq.s32.totalorder %s11, 0
    %p94 = por %p92, %p93
    %p95 = scmp.ne.s32.totalorder %s87, %s89
    %p96 = scmp.eq.s32.totalorder %s16, 1
    %p97 = por %p95, %p96
    %p98 = scmp.ne.s32.totalorder %s89, %s90
    %p99 = scmp.eq.s32.totalorder %s16, 0
    %p100 = por %p98, %p99
    %p101 = scmp.ne.s32.totalorder %s89, %s90
    %p102 = scmp.eq.s32.totalorder %s17, 1
    %p103 = por %p101, %p102
    %p105 = scmp.ne.s32.totalorder %s90, %s104
    %p106 = scmp.eq.s32.totalorder %s17, 0
    %p107 = por %p105, %p106
    %s109 = sadd.s32 %s108, 1
    %p112 = scmp.eq.s32.totalorder %s11, 1
    %p113 = scmp.ne.s32.totalorder %s108, %s110
    %p114 = scmp.eq.s32.totalorder %s11, 0
    %p115 = por %p113, %p114
    %p116 = scmp.ne.s32.totalorder %s108, %s110
    %p117 = scmp.eq.s32.totalorder %s16, 1
    %p118 = por %p116, %p117
    %p119 = scmp.ne.s32.totalorder %s110, %s111
    %p120 = scmp.eq.s32.totalorder %s16, 0
    %p121 = por %p119, %p120
    %p122 = scmp.ne.s32.totalorder %s110, %s111
    %p123 = scmp.eq.s32.totalorder %s17, 1
    %p124 = por %p122, %p123
    %p126 = scmp.ne.s32.totalorder %s111, %s125
    %p127 = scmp.eq.s32.totalorder %s17, 0
    %p128 = por %p126, %p127
    %s129 = ssub.s32 %s11, %s18
    %p130 = scmp.eq.s32.totalorder %s129, 0
    %s132 = sadd.s32 %s131, 1
    %s133 = scalar_select %p130, %s131, %s132
    %p136 = pneg %p130
    %p137 = scmp.eq.s32.totalorder %s11, 1
    %p138 = por %p136, %p137
    %p139 = scmp.ne.s32.totalorder %s131, %s134
    %p140 = scmp.eq.s32.totalorder %s11, 0
    %p141 = por %p139, %p140
    %p142 = scmp.ne.s32.totalorder %s131, %s134
    %p143 = scmp.eq.s32.totalorder %s16, 1
    %p144 = por %p142, %p143
    %p145 = scmp.ne.s32.totalorder %s134, %s135
    %p146 = scmp.eq.s32.totalorder %s16, 0
    %p147 = por %p145, %p146
    %p148 = scmp.ne.s32.totalorder %s134, %s135
    %p149 = scmp.eq.s32.totalorder %s17, 1
    %p150 = por %p148, %p149
    %p152 = scmp.ne.s32.totalorder %s135, %s151
    %p153 = scmp.eq.s32.totalorder %s17, 0
    %p154 = por %p152, %p153
    %p155 = scmp.le.s32.totalorder 1, %s11
    %p156 = scmp.lt.s32.totalorder %s11, 3
    %p157 = pnand %p155, %p156
    %p158 = pneg %p157
    // Predicated region
    $region9: #{channel_attention.1} parent=5 // pred_check
      _
    $region10: #{channel_attention.1} parent=5 // pred_check_branch
      %160 = sbr.rel (%p157) target = $region12
    $region11: #{channel_attention.1} parent=5 // pred_region
      %s161 = ssub.s32 %s11, 1
      // Predicated region
      $region13: #{channel_attention.1} parent=11 // pred_check
        %p162 = pneg %p58
      $region14: #{channel_attention.1} parent=11 // pred_check_branch
        %164 = sbr.rel (%p162) target = $region16
      $region15: #{channel_attention.1} parent=11 // pred_region
        _
      $region16: #{channel_attention.1} parent=11 // pred_fallthru
        _
      // Predicated region
      $region17: #{channel_attention.1} parent=11 // pred_check
        %p165 = pneg %p79
      $region18: #{channel_attention.1} parent=11 // pred_check_branch
        %167 = sbr.rel (%p165) target = $region20
      $region19: #{channel_attention.1} parent=11 // pred_region
        _
      $region20: #{channel_attention.1} parent=11 // pred_fallthru
        _
      // Predicated region
      $region21: #{channel_attention.1} parent=11 // pred_check
        %p168 = pneg %p100
      $region22: #{channel_attention.1} parent=11 // pred_check_branch
        %170 = sbr.rel (%p168) target = $region24
      $region23: #{channel_attention.1} parent=11 // pred_region
        _
      $region24: #{channel_attention.1} parent=11 // pred_fallthru
        _
      // Predicated region
      $region25: #{channel_attention.1} parent=11 // pred_check
        %p171 = pneg %p121
      $region26: #{channel_attention.1} parent=11 // pred_check_branch
        %173 = sbr.rel (%p171) target = $region28
      $region27: #{channel_attention.1} parent=11 // pred_region
        _
      $region28: #{channel_attention.1} parent=11 // pred_fallthru
        _
    $region12: #{channel_attention.1} parent=5 // pred_fallthru
      _
    %p174 = scmp.lt.s32.totalorder %s11, 2
    // Predicated region
    $region29: #{channel_attention.1} parent=5 // pred_check
      %p175 = pneg %p174
    $region30: #{channel_attention.1} parent=5 // pred_check_branch
      %177 = sbr.rel (%p175) target = $region32
    $region31: #{channel_attention.1} parent=5 // pred_region
      // Predicated region
      $region33: #{channel_attention.1} parent=31 // pred_check
        %p178 = pneg %p31
      $region34: #{channel_attention.1} parent=31 // pred_check_branch
        %180 = sbr.rel (%p178) target = $region36
      $region35: #{channel_attention.1} parent=31 // pred_region
        %p181 = scmp.lt.s32.totalorder %s11, 1
        %s182 = scalar_select %p181, %s11, 1
        %s183 = smul.addr %s182, 8
        %s184 = smul.addr %s183, 8
        %s185 = scalar_lea.vmem %s0, %s184
      $region36: #{channel_attention.1} parent=31 // pred_fallthru
        _
    $region32: #{channel_attention.1} parent=5 // pred_fallthru
      _
    %p186 = scmp.le.s32.totalorder 1, %s11
    %p187 = scmp.lt.s32.totalorder %s11, 3
    %p188 = pnand %p186, %p187
    %p189 = pneg %p188
    // Predicated region
    $region37: #{channel_attention.1} parent=5 // pred_check
      _
    $region38: #{channel_attention.1} parent=5 // pred_check_branch
      %191 = sbr.rel (%p188) target = $region40
    $region39: #{channel_attention.1} parent=5 // pred_region
      %s192 = ssub.s32 %s11, 1
      %p193 = scmp.lt.s32.totalorder %s16, 1
      %s194 = scalar_select %p193, %s16, 1
      %s195 = smul.addr %s194, 8
      %s196 = smul.addr %s195, 8
      %s197 = scalar_lea.vmem %s0, %s196
      %p198 = pneg %p37
      %p199 = pneg %p34
      %p200 = pneg %p58
      %p201 = pneg %p55
      %p202 = pneg %p79
      %p203 = pneg %p76
      %p204 = pneg %p100
      %p205 = pneg %p97
      %p206 = pneg %p121
      %p207 = pneg %p118
      %p208 = pneg %p147
      %p209 = pneg %p144
      %p210 = scmp.lt.s32.totalorder %s16, 1
      %s211 = scalar_select %p210, %s16, 1
      %s212 = smul.addr %s211, 8
      %s213 = smul.addr %s212, 8
      %s214 = scalar_lea.vmem %s5, %s213
      %p215 = scmp.lt.s32.totalorder %s16, 1
      %s216 = scalar_select %p215, %s16, 1
      %s217 = smul.addr %s216, 8
      %s218 = smul.addr %s217, 8
      %s219 = scalar_lea.vmem %s0, %s218
      %p220 = scmp.lt.s32.totalorder %s16, 1
      %s221 = scalar_select %p220, %s16, 1
      %s222 = smul.addr %s221, 8
      %s223 = smul.addr %s222, 8
      %s224 = scalar_lea.vmem %s5, %s223
      %v225 = vld [vmem:[%s219] sm:$0xff]
      %v226 = vld [vmem:[%s219 + $0x8] sm:$0xff]
      %v227 = vld [vmem:[%s219 + $0x10] sm:$0xff]
      %v228 = vld [vmem:[%s219 + $0x18] sm:$0xff]
      %v229 = vld [vmem:[%s219 + $0x20] sm:$0xff]
      %v230 = vld [vmem:[%s219 + $0x28] sm:$0xff]
      %v231 = vld [vmem:[%s219 + $0x30] sm:$0xff]
      %v232 = vld [vmem:[%s219 + $0x38] sm:$0xff]
      %v233 = vadd.f32 %v225, %v226
      %234 = vadd.xlane.f32.xlu0 %v233
      %v235 = vpop.xlane.xlu0 %234
      %v236 = vadd.f32 %v227, %v228
      %237 = vadd.xlane.f32.xlu0 %v236
      %v238 = vpop.xlane.xlu0 %237
      %v239 = vadd.f32 %v229, %v230
      %240 = vadd.xlane.f32.xlu0 %v239
      %v241 = vpop.xlane.xlu0 %240
      %v242 = vadd.f32 %v231, %v232
      %243 = vadd.xlane.f32.xlu0 %v242
      %v244 = vpop.xlane.xlu0 %243
      %245 = vxpose.xlu0.b32.start [1/16] %v235, 128
      %246 = vxpose.xlu0.b32.cont [2/16] %v238, 128
      %247 = vxpose.xlu0.b32.cont [3/16] %v241, 128
      %248 = vxpose.xlu0.b32.cont [4/16] %v244, 128
      %249 = vxpose.xlu0.b32.cont [5/16] 0.0, 128
      %250 = vxpose.xlu0.b32.cont [6/16] 0.0, 128
      %251 = vxpose.xlu0.b32.cont [7/16] 0.0, 128
      %252 = vxpose.xlu0.b32.cont [8/16] 0.0, 128
      %253 = vxpose.xlu0.b32.cont [9/16] 0.0, 128
      %254 = vxpose.xlu0.b32.cont [10/16] 0.0, 128
      %255 = vxpose.xlu0.b32.cont [11/16] 0.0, 128
      %256 = vxpose.xlu0.b32.cont [12/16] 0.0, 128
      %257 = vxpose.xlu0.b32.cont [13/16] 0.0, 128
      %258 = vxpose.xlu0.b32.cont [14/16] 0.0, 128
      %259 = vxpose.xlu0.b32.cont [15/16] 0.0, 128
      %260 = vxpose.xlu0.b32.end [16/16] 0.0, 128
      %v261 = vpop.trf.xlu0
      %v262 = vpop.trf.xlu0
      %v263 = vpop.trf.xlu0
      %v264 = vpop.trf.xlu0
      %v265 = vpop.trf.xlu0
      %v266 = vpop.trf.xlu0
      %v267 = vpop.trf.xlu0
      %v268 = vpop.trf.xlu0
      %v269 = vpop.trf.xlu0
      %v270 = vpop.trf.xlu0
      %v271 = vpop.trf.xlu0
      %v272 = vpop.trf.xlu0
      %v273 = vpop.trf.xlu0
      %v274 = vpop.trf.xlu0
      %v275 = vpop.trf.xlu0
      %v276 = vpop.trf.xlu0
      %v277 = vmul.f32 %v261, 0.00390625
      %v278 = vld [vmem:[%s1] sm:$0xff]
      %v279 = vld [vmem:[%s1 + $0x8] sm:$0xff]
      %v280 = vld [vmem:[%s1 + $0x10] sm:$0xff]
      %v281 = vld [vmem:[%s1 + $0x18] sm:$0xff]
      %v282 = vld [vmem:[%s2] sm:$0x1]
      %vm283 = vcmask 261120
      %v285 = vsel %vm283, %v277, 0
      %287 = vmatprep.subr.mxu0 0.0
      %288 = vmatpush1.msra.mxu0 %v278
      %289 = vmatprep.subr.mxu0 0.0
      %290 = vmatpush1.msra.mxu0 %v279
      %291 = vmatprep.subr.mxu0 0.0
      %292 = vmatpush1.msra.mxu0 %v280
      %293 = vmatprep.subr.mxu0 0.0
      %294 = vmatpush1.msra.mxu0 %v281
      %295 = vmatprep.subr.mxu0 0.0
      %296 = vmatpush1.msra.mxu0 0.0
      %297 = vmatprep.subr.mxu0 0.0
      %298 = vmatpush1.msra.mxu0 0.0
      %299 = vmatprep.subr.mxu0 0.0
      %300 = vmatpush1.msra.mxu0 0.0
      %301 = vmatprep.subr.mxu0 0.0
      %302 = vmatpush1.msra.mxu0 0.0
      %303 = vmatprep.subr.mxu0 0.0
      %304 = vmatpush1.msra.mxu0 0.0
      %305 = vmatprep.subr.mxu0 0.0
      %306 = vmatpush1.msra.mxu0 0.0
      %307 = vmatprep.subr.mxu0 0.0
      %308 = vmatpush1.msra.mxu0 0.0
      %309 = vmatprep.subr.mxu0 0.0
      %310 = vmatpush1.msra.mxu0 0.0
      %311 = vmatprep.subr.mxu0 0.0
      %312 = vmatpush1.msra.mxu0 0.0
      %313 = vmatprep.subr.mxu0 0.0
      %314 = vmatpush1.msra.mxu0 0.0
      %315 = vmatprep.subr.mxu0 0.0
      %316 = vmatpush1.msra.mxu0 0.0
      %317 = vmatprep.subr.mxu0 0.0
      %318 = vmatpush1.msra.mxu0 0.0
      %319 = vmatprep.subr.mxu0 0.0
      %320 = vmatpush1.msra.mxu0 0.0
      %321 = vmatprep.subr.mxu0 0.0
      %322 = vmatpush1.msra.mxu0 0.0
      %323 = vmatprep.subr.mxu0 0.0
      %324 = vmatpush1.msra.mxu0 0.0
      %325 = vmatprep.subr.mxu0 0.0
      %326 = vmatpush1.msra.mxu0 0.0
      %327 = vmatprep.subr.mxu0 0.0
      %328 = vmatpush1.msra.mxu0 0.0
      %329 = vmatprep.subr.mxu0 0.0
      %330 = vmatpush1.msra.mxu0 0.0
      %331 = vmatprep.subr.mxu0 0.0
      %332 = vmatpush1.msra.mxu0 0.0
      %333 = vmatprep.subr.mxu0 0.0
      %334 = vmatpush1.msra.mxu0 0.0
      %335 = vmatprep.subr.mxu0 0.0
      %336 = vmatpush1.msra.mxu0 0.0
      %337 = vmatprep.subr.mxu0 0.0
      %338 = vmatpush1.msra.mxu0 0.0
      %339 = vmatprep.subr.mxu0 0.0
      %340 = vmatpush1.msra.mxu0 0.0
      %341 = vmatprep.subr.mxu0 0.0
      %342 = vmatpush1.msra.mxu0 0.0
      %343 = vmatprep.subr.mxu0 0.0
      %344 = vmatpush1.msra.mxu0 0.0
      %345 = vmatprep.subr.mxu0 0.0
      %346 = vmatpush1.msra.mxu0 0.0
      %347 = vmatprep.subr.mxu0 0.0
      %348 = vmatpush1.msra.mxu0 0.0
      %349 = vmatprep.subr.mxu0 0.0
      %350 = vmatpush1.msra.mxu0 0.0
      %351 = vmatprep.mubr.f32.mxu0 0.0
      %352 = vmatmul.mubr.f32.gmra.mrb[0].mxu0 %v285
      %v353 = vpop.f32.mrb[0].mxu0
      %v354 = vadd.f32 %v282, %v353
      %v355 = vpop.f32.mrb[0].mxu0
      %356 = vdwg.mxu0
      %v357 = vld [vmem:[%s3] sm:$0xf]
      %v358 = vld [vmem:[%s4] sm:$0x1]
      %vm359 = vcmask 31744
      %v361 = vsel %vm359, %v354, 0
      %vm363 = vcmask 1043456
      %v365 = vsel %vm363, %v357, 0
      %367 = vmatprep.subr.mxu0 0.0
      %368 = vmatpush1.msra.mxu0 %v365
      %369 = vmatprep.subr.mxu0 0.0
      %370 = vmatpush1.msra.mxu0 0.0
      %371 = vmatprep.subr.mxu0 0.0
      %372 = vmatpush1.msra.mxu0 0.0
      %373 = vmatprep.subr.mxu0 0.0
      %374 = vmatpush1.msra.mxu0 0.0
      %375 = vmatprep.subr.mxu0 0.0
      %376 = vmatpush1.msra.mxu0 0.0
      %377 = vmatprep.subr.mxu0 0.0
      %378 = vmatpush1.msra.mxu0 0.0
      %379 = vmatprep.subr.mxu0 0.0
      %380 = vmatpush1.msra.mxu0 0.0
      %381 = vmatprep.subr.mxu0 0.0
      %382 = vmatpush1.msra.mxu0 0.0
      %383 = vmatprep.subr.mxu0 0.0
      %384 = vmatpush1.msra.mxu0 0.0
      %385 = vmatprep.subr.mxu0 0.0
      %386 = vmatpush1.msra.mxu0 0.0
      %387 = vmatprep.subr.mxu0 0.0
      %388 = vmatpush1.msra.mxu0 0.0
      %389 = vmatprep.subr.mxu0 0.0
      %390 = vmatpush1.msra.mxu0 0.0
      %391 = vmatprep.subr.mxu0 0.0
      %392 = vmatpush1.msra.mxu0 0.0
      %393 = vmatprep.subr.mxu0 0.0
      %394 = vmatpush1.msra.mxu0 0.0
      %395 = vmatprep.subr.mxu0 0.0
      %396 = vmatpush1.msra.mxu0 0.0
      %397 = vmatprep.subr.mxu0 0.0
      %398 = vmatpush1.msra.mxu0 0.0
      %399 = vmatprep.subr.mxu0 0.0
      %400 = vmatpush1.msra.mxu0 0.0
      %401 = vmatprep.subr.mxu0 0.0
      %402 = vmatpush1.msra.mxu0 0.0
      %403 = vmatprep.subr.mxu0 0.0
      %404 = vmatpush1.msra.mxu0 0.0
      %405 = vmatprep.subr.mxu0 0.0
      %406 = vmatpush1.msra.mxu0 0.0
      %407 = vmatprep.subr.mxu0 0.0
      %408 = vmatpush1.msra.mxu0 0.0
      %409 = vmatprep.subr.mxu0 0.0
      %410 = vmatpush1.msra.mxu0 0.0
      %411 = vmatprep.subr.mxu0 0.0
      %412 = vmatpush1.msra.mxu0 0.0
      %413 = vmatprep.subr.mxu0 0.0
      %414 = vmatpush1.msra.mxu0 0.0
      %415 = vmatprep.subr.mxu0 0.0
      %416 = vmatpush1.msra.mxu0 0.0
      %417 = vmatprep.subr.mxu0 0.0
      %418 = vmatpush1.msra.mxu0 0.0
      %419 = vmatprep.subr.mxu0 0.0
      %420 = vmatpush1.msra.mxu0 0.0
      %421 = vmatprep.subr.mxu0 0.0
      %422 = vmatpush1.msra.mxu0 0.0
      %423 = vmatprep.subr.mxu0 0.0
      %424 = vmatpush1.msra.mxu0 0.0
      %425 = vmatprep.subr.mxu0 0.0
      %426 = vmatpush1.msra.mxu0 0.0
      %427 = vmatprep.subr.mxu0 0.0
      %428 = vmatpush1.msra.mxu0 0.0
      %429 = vmatprep.subr.mxu0 0.0
      %430 = vmatpush1.msra.mxu0 0.0
      %431 = vmatprep.mubr.f32.mxu0 0.0
      %432 = vmatmul.mubr.f32.gmra.mrb[0].mxu0 %v361
      %v433 = vpop.f32.mrb[0].mxu0
      %v434 = vadd.f32 %v358, %v433
      %v435 = vpop.f32.mrb[0].mxu0
      %436 = vdwg.mxu0
      %v437 = vxor.u32 %v434, 2147483648
      %v438 = vmul.f32 %v437, 1.442695
      %v439 = vpow.pop %v438
      %v440 = vadd.f32 %v439, 1.0
      %v441 = vrcp.pop %v440
      %v442 = vmul.f32 1.0, %v441
      %443 = vxpose.xlu0.b32.start [1/16] %v442, 128
      %444 = vxpose.xlu0.b32.cont [2/16] 0.0, 128
      %445 = vxpose.xlu0.b32.cont [3/16] 0.0, 128
      %446 = vxpose.xlu0.b32.cont [4/16] 0.0, 128
      %447 = vxpose.xlu0.b32.cont [5/16] 0.0, 128
      %448 = vxpose.xlu0.b32.cont [6/16] 0.0, 128
      %449 = vxpose.xlu0.b32.cont [7/16] 0.0, 128
      %450 = vxpose.xlu0.b32.cont [8/16] 0.0, 128
      %451 = vxpose.xlu0.b32.cont [9/16] 0.0, 128
      %452 = vxpose.xlu0.b32.cont [10/16] 0.0, 128
      %453 = vxpose.xlu0.b32.cont [11/16] 0.0, 128
      %454 = vxpose.xlu0.b32.cont [12/16] 0.0, 128
      %455 = vxpose.xlu0.b32.cont [13/16] 0.0, 128
      %456 = vxpose.xlu0.b32.cont [14/16] 0.0, 128
      %457 = vxpose.xlu0.b32.cont [15/16] 0.0, 128
      %458 = vxpose.xlu0.b32.end [16/16] 0.0, 128
      %v459 = vpop.trf.xlu0
      %v460 = vpop.trf.xlu0
      %v461 = vpop.trf.xlu0
      %v462 = vpop.trf.xlu0
      %v463 = vpop.trf.xlu0
      %v464 = vpop.trf.xlu0
      %v465 = vpop.trf.xlu0
      %v466 = vpop.trf.xlu0
      %v467 = vpop.trf.xlu0
      %v468 = vpop.trf.xlu0
      %v469 = vpop.trf.xlu0
      %v470 = vpop.trf.xlu0
      %v471 = vpop.trf.xlu0
      %v472 = vpop.trf.xlu0
      %v473 = vpop.trf.xlu0
      %v474 = vpop.trf.xlu0
      %476 = vset.pattern.permute.xlu0 0
      %477 = vperm.xlu0 %476, %v459
      %v478 = vpop.permute.xlu0 %477
      %481 = vset.pattern.permute.xlu0 0
      %482 = vperm.xlu0 %481, %v460
      %v483 = vpop.permute.xlu0 %482
      %486 = vset.pattern.permute.xlu0 0
      %487 = vperm.xlu0 %486, %v461
      %v488 = vpop.permute.xlu0 %487
      %491 = vset.pattern.permute.xlu0 0
      %492 = vperm.xlu0 %491, %v462
      %v493 = vpop.permute.xlu0 %492
      %v495 = vmul.f32 %v225, %v478
      %v496 = vmul.f32 %v226, %v478
      %v497 = vmul.f32 %v227, %v483
      %v498 = vmul.f32 %v228, %v483
      %v499 = vmul.f32 %v229, %v488
      %v500 = vmul.f32 %v230, %v488
      %v501 = vmul.f32 %v231, %v493
      %v502 = vmul.f32 %v232, %v493
      %503 = vst [vmem:[%s224] sm:$0xff] %v495
      %504 = vst [vmem:[%s224 + $0x8] sm:$0xff] %v496
      %505 = vst [vmem:[%s224 + $0x10] sm:$0xff] %v497
      %506 = vst [vmem:[%s224 + $0x18] sm:$0xff] %v498
      %507 = vst [vmem:[%s224 + $0x20] sm:$0xff] %v499
      %508 = vst [vmem:[%s224 + $0x28] sm:$0xff] %v500
      %509 = vst [vmem:[%s224 + $0x30] sm:$0xff] %v501
      %510 = vst [vmem:[%s224 + $0x38] sm:$0xff] %v502
      %p511 = scmp.lt.s32.totalorder %s16, 1
      %s512 = scalar_select %p511, %s16, 1
      %s513 = smul.addr %s512, 8
      %s514 = smul.addr %s513, 8
      %s515 = scalar_lea.vmem %s5, %s514
      // Predicated region
      $region41: #{channel_attention.1} parent=39 // pred_check
        %p516 = pneg %p144
      $region42: #{channel_attention.1} parent=39 // pred_check_branch
        %518 = sbr.rel (%p516) target = $region44
      $region43: #{channel_attention.1} parent=39 // pred_region
        _
      $region44: #{channel_attention.1} parent=39 // pred_fallthru
        _
    $region40: #{channel_attention.1} parent=5 // pred_fallthru
      _
    %p519 = scmp.le.s32.totalorder 2, %s11
    // Predicated region
    $region45: #{channel_attention.1} parent=5 // pred_check
      %p520 = pneg %p519
    $region46: #{channel_attention.1} parent=5 // pred_check_branch
      %522 = sbr.rel (%p520) target = $region48
    $region47: #{channel_attention.1} parent=5 // pred_region
      %s523 = ssub.s32 %s11, 2
      // Predicated region
      $region49: #{channel_attention.1} parent=47 // pred_check
        %p524 = pneg %p150
      $region50: #{channel_attention.1} parent=47 // pred_check_branch
        %526 = sbr.rel (%p524) target = $region52
      $region51: #{channel_attention.1} parent=47 // pred_region
        %p527 = scmp.lt.s32.totalorder %s17, 1
        %s528 = scalar_select %p527, %s17, 1
        %s529 = smul.addr %s528, 8
        %s530 = smul.addr %s529, 8
        %s531 = scalar_lea.vmem %s5, %s530
      $region52: #{channel_attention.1} parent=47 // pred_fallthru
        _
    $region48: #{channel_attention.1} parent=5 // pred_fallthru
      _
  $region6: #{channel_attention.1} parent=0 // loop_footer
    %s15 = sadd.s32 1, %s11
  $region7: #{channel_attention.1} parent=0 // loop_footer_branch
    %10 = sbr.rel target = $region3
  $region8: #{channel_attention.1} parent=0 // loop_exit
    _

</llo_original>
